<compile_context>
chip_gen: v5e
topology: v5e:2x2
jax: 0.10.0
libtpu: 0.0.40
codegen_flags: <defaults>
</compile_context>

<pallas_src>
import functools

import jax
import jax.numpy as jnp
from jax.experimental import pallas as pl
from jax.experimental.pallas import tpu as pltpu


_TARGET_BLOCK_BYTES = 2 * 1024 * 1024   # padded bytes for one bool output block
_MIN_PALLAS_BYTES = 256 * 1024          # below this, use the XLA fallback
_MEGACORE_SPLIT_BYTES = 256 * 1024      # force >=2 grid blocks above this


def _round_up(x: int, m: int) -> int:
    return (x + m - 1) // m * m


def _pad_masking_kernel(x_ref, o_ref, *, pad_idx: int):
    # x_ref: (tb, 1, K) int32 tokens; the first `offset` key columns hold a
    #        sentinel value != pad_idx so they compare to False (torch's
    #        zeros prefix).
    # o_ref: (tb, tq, K) bool mask block.
    row = x_ref[...] == pad_idx                       # (tb, 1, K) mask
    o_ref[...] = jnp.broadcast_to(row, o_ref.shape)   # replicated over tq, bool store


def _choose_tiles(b: int, s: int, k: int):
    """Pick (batch_tile, query_tile); sized by padded (32,128) bool tile bytes."""
    k_pad = _round_up(k, 128)
    row_pad_bytes = _round_up(s, 32) * k_pad  # one batch row's padded block bytes
    if row_pad_bytes <= _TARGET_BLOCK_BYTES:
        # Small per-row mask: keep the full query axis; batch rows per step to
        # amortize the ~0.35 us per-grid-step overhead.
        tq = s
        tb = min(b, max(1, _TARGET_BLOCK_BYTES // row_pad_bytes))
    else:
        # Large per-row mask: tile the query axis (multiple of 32 sublanes for
        # the packed 1-byte output tile).
        tb = 1
        tq = max(32, (_TARGET_BLOCK_BYTES // k_pad) // 32 * 32)
        tq = min(tq, s)

    # Megacore (v7x has 2 TCs): guarantee >=2 blocks along the parallel batch
    # axis whenever the mask is big enough for the split to matter.
    total_padded = b * row_pad_bytes
    n_blocks = (-(-b // tb)) * (-(-s // tq))
    if total_padded > _MEGACORE_SPLIT_BYTES and n_blocks < 2 and b >= 2:
        tb = -(-b // 2)
    return tb, tq


def _reference(x: jax.Array, pad_idx: int, offset: int = 0) -> jax.Array:
    """Pure-XLA equivalent (also used as the tiny-output fast path)."""
    is_pad = (x == pad_idx)[..., None, :]                              # (..., 1, S)
    shifted = jnp.zeros(x.shape[:-1] + (1, offset), dtype=jnp.bool_)   # (..., 1, off)
    mask = jnp.concatenate([shifted, is_pad], axis=-1)                 # (..., 1, S+off)
    return jnp.broadcast_to(mask, x.shape + (mask.shape[-1],))


def pad_masking(x: jax.Array, pad_idx: int, offset: int = 0,
                *, force_pallas: bool = False) -> jax.Array:
    """JAX/Pallas equivalent of PadMasking.forward.

    x:      (..., seq_len) integer tokens
    return: (..., seq_len, seq_len + offset) bool
    """
    if offset < 0:
        raise ValueError(f"offset must be >= 0, got {offset}")

    orig_shape = x.shape
    seq_len = orig_shape[-1]
    batch_dims = orig_shape[:-1]
    b = 1
    for d in batch_dims:
        b *= d
    k = seq_len + offset

    out_bytes = b * seq_len * k  # bool output, 1 byte/elem
    if not force_pallas and out_bytes < _MIN_PALLAS_BYTES:
        # Tiny mask: fixed pallas_call overhead dominates; fused XLA wins.
        return _reference(x, pad_idx, offset)

    # Flatten leading dims; present the token row as (B, 1, K) so the input
    # block's trailing dims are full-extent.  Left-pad the key axis with a
    # non-pad sentinel so the first `offset` key positions compare to False.
    x3d = jnp.reshape(x, (b, 1, seq_len)).astype(jnp.int32)
    if offset > 0:
        sentinel = pad_idx ^ 1  # guaranteed != pad_idx
        x3d = jnp.pad(x3d, ((0, 0), (0, 0), (offset, 0)),
                      constant_values=sentinel)

    tb, tq = _choose_tiles(b, seq_len, k)
    grid = (pl.cdiv(b, tb), pl.cdiv(seq_len, tq))

    kernel = functools.partial(_pad_masking_kernel, pad_idx=pad_idx)

    out = pl.pallas_call(
        kernel,
        out_shape=jax.ShapeDtypeStruct((b, seq_len, k), jnp.bool_),
        grid_spec=pltpu.PrefetchScalarGridSpec(
            num_scalar_prefetch=0,
            grid=grid,
            in_specs=[pl.BlockSpec((tb, 1, k), lambda bi, qi: (bi, 0, 0))],
            out_specs=pl.BlockSpec((tb, tq, k), lambda bi, qi: (bi, qi, 0)),
        ),
        compiler_params=pltpu.CompilerParams(
            dimension_semantics=("parallel", "parallel"),
        ),
        cost_estimate=pl.CostEstimate(
            flops=b * k,                                # one compare per key elem
            transcendentals=0,
            bytes_accessed=b * seq_len * k + 4 * b * k,  # bool out + int32 tokens
        ),
    )(x3d)

    # Restore leading dims (metadata-only reshape).
    return jnp.reshape(out, batch_dims + (seq_len, k))


if __name__ == "__main__":
    key = jax.random.PRNGKey(0)
    pad_idx = 0
    k1, k2 = jax.random.split(key)

    # Case 1: tiny shape (the torch-example regime) -- auto path is the fused
    # XLA broadcast fallback.
    batch, seq_len, offset = 2, 8, 2
    x_small = jax.random.randint(k1, (batch, seq_len), 0, 5, dtype=jnp.int32)
    out_small = jax.block_until_ready(pad_masking(x_small, pad_idx, offset))
    ref_small = _reference(x_small, pad_idx, offset)
    assert out_small.shape == (batch, seq_len, seq_len + offset), out_small.shape
    assert out_small.dtype == jnp.bool_, out_small.dtype
    assert bool(jnp.all(out_small == ref_small)), "fallback mismatch vs reference"

    # Case 2: same tiny shape, forced through the Pallas kernel.
    out_forced = jax.block_until_ready(
        pad_masking(x_small, pad_idx, offset, force_pallas=True))
    assert out_forced.shape == ref_small.shape
    assert out_forced.dtype == jnp.bool_
    assert bool(jnp.all(out_forced == ref_small)), "pallas mismatch vs reference"

    # Case 3: moderate shape that naturally takes the Pallas path
    # (exercises the batch-split / megacore grid).
    batch3, seq3, off3 = 4, 320, 2
    x_big = jax.random.randint(k2, (batch3, seq3), 0, 7, dtype=jnp.int32)
    out_big = jax.block_until_ready(pad_masking(x_big, pad_idx, off3))
    ref_big = _reference(x_big, pad_idx, off3)
    assert out_big.shape == (batch3, seq3, seq3 + off3), out_big.shape
    assert out_big.dtype == jnp.bool_, out_big.dtype
    assert bool(jnp.all(out_big == ref_big)), "pallas (large) mismatch vs reference"

    print("KERNEL_OK")
</pallas_src>

<mosaic_0001>
module attributes {stable_mosaic.version = 11 : i64} {
  func.func @_pad_masking_kernel(%arg0: i32, %arg1: i32, %arg2: memref<2x1x10xi32, #tpu.memory_space<vmem>>, %arg3: memref<2x8x10xi32, #tpu.memory_space<vmem>>) attributes {dimension_semantics = [#tpu.dimension_semantics<parallel>, #tpu.dimension_semantics<parallel>], iteration_bounds = array<i64: 1, 1>, scalar_prefetch = 0 : i64, scratch_operands = 0 : i64, tpu.core_type = #tpu.core_type<tc>, window_params = [{transform_indices = @transform_0, window_bounds = array<i64: 2, 1, 10>}, {transform_indices = @transform_1, window_bounds = array<i64: 2, 8, 10>}]} {
    %c0 = arith.constant 0 : index
    %c0_0 = arith.constant 0 : index
    %c0_1 = arith.constant 0 : index
    %0 = vector.load %arg2[%c0, %c0_0, %c0_1] : memref<2x1x10xi32, #tpu.memory_space<vmem>>, vector<2x1x10xi32>
    %c0_i32 = arith.constant 0 : i32
    %1 = vector.broadcast %c0_i32 : i32 to vector<2x1x10xi32>
    %2 = arith.cmpi eq, %0, %1 : vector<2x1x10xi32>
    %3 = vector.shape_cast %2 : vector<2x1x10xi1> to vector<2x1x10xi1>
    %4 = vector.broadcast %3 : vector<2x1x10xi1> to vector<2x8x10xi1>
    %c0_2 = arith.constant 0 : index
    %c0_3 = arith.constant 0 : index
    %c0_4 = arith.constant 0 : index
    %5 = vector.load %arg3[%c0_2, %c0_3, %c0_4] : memref<2x8x10xi32, #tpu.memory_space<vmem>>, vector<2x8x10xi32>
    %6 = arith.extui %4 : vector<2x8x10xi1> to vector<2x8x10xi32>
    %cst = arith.constant dense<0> : vector<2x8x10xi32>
    %7 = arith.cmpi ne, %5, %cst : vector<2x8x10xi32>
    tpu.vector_store %arg3[%c0_2, %c0_3, %c0_4], %6 {strides = array<i32>} : memref<2x8x10xi32, #tpu.memory_space<vmem>>, vector<2x8x10xi32>,
    return
  }
  func.func @transform_0(%arg0: i32, %arg1: i32) -> (i32, i32, i32) {
    %c0_i32 = arith.constant 0 : i32
    %c0_i32_0 = arith.constant 0 : i32
    %c0_i32_1 = arith.constant 0 : i32
    return %arg0, %c0_i32, %c0_i32_0 : i32, i32, i32
  }
  func.func @transform_1(%arg0: i32, %arg1: i32) -> (i32, i32, i32) {
    %c0_i32 = arith.constant 0 : i32
    %c0_i32_0 = arith.constant 0 : i32
    return %arg0, %arg1, %c0_i32 : i32, i32, i32
  }
}

</mosaic_0001>

<llo_original>
// kernel: tpu_custom_call.1
$region0: #{tpu_custom_call.1}
  #allocation0 [shape = 'u32[]', space=smem, size = 0x4, offset = 0x4, fixed_abs, tag = 'smem constant byte address 0x4 - core index']
  #allocation1 [shape = 'u32[72,128]{1,0:T(1,128)}', space=vmem, size = 0x9000, scoped, tag = 'internal scratch']
  %s0 = inlined_call_operand.hbm [shape: s32[2,1,10], index: 0, kind: input, shape index: {}]
  %s1 = inlined_call_operand.vmem [shape: s32[2,8,10], index: 1, kind: output, shape index: {}]
  %s2 = sld [smem:[#allocation0]]
  $region18: #{tpu_custom_call.1} parent=0
    _
  %s4 = ssub.s32 1, %s2
  %s5 = scalar_select 0, %s4, %s2
  $region1: #{tpu_custom_call.1} parent=0
    #allocation2 [shape = 'u8[1024]{0}', space=vmem, size = 0x400, scoped, tag = 'input window, operand 0, single buffered']
    #allocation3 [shape = 's32[1]{0}', space=sflag, size = 0x4, scoped, tag = 'scoped memory for tpu_custom_call.1']
    %6 = vsyncpa [#allocation3], 0
    // Predicated region
    $region2: #{tpu_custom_call.1} parent=1 // pred_check
      _
    $region3: #{tpu_custom_call.1} parent=1 // pred_check_branch
      %8 = sbr.rel (0) target = $region5
    $region4: #{tpu_custom_call.1} parent=1 // pred_region
      %10 = vsyncadd [#allocation3], 0
      %s11 = sshll.u32 %s0, 4
      %s12 = int_to_ptr.hbm [resolvable:$true] %s11
      %s13 = sshll.u32 [#allocation2], 4
      %s14 = int_to_ptr.vmem [resolvable:$true] %s13
      %19 = dma.hbm_to_vmem [thread:$0]  %s12, 32, %s14, [#allocation3], 16, 16, 1
    $region5: #{tpu_custom_call.1} parent=1 // pred_fallthru
      _
    // Predicated region
    $region6: #{tpu_custom_call.1} parent=1 // pred_check
      _
    $region7: #{tpu_custom_call.1} parent=1 // pred_check_branch
      %21 = sbr.rel (0) target = $region9
    $region8: #{tpu_custom_call.1} parent=1 // pred_region
      %23 = dma.done [#allocation3], 32
    $region9: #{tpu_custom_call.1} parent=1 // pred_fallthru
      _
    %v24 = vld [vmem:[#allocation2] sm:$0x1]
    %v25 = vld [vmem:[#allocation2 + $0x1] sm:$0x1]
    %vm26 = vcmp.eq.s32.totalorder %v24, 0
    %vm27 = vcmp.eq.s32.totalorder %v25, 0
    %v28 = vsel %vm26, 1, 0
    %v29 = vsel %vm27, 1, 0
    %v30 = vperm.slane %v28, 0
    %v31 = vperm.slane %v29, 0
    %vm32 = vcmp.eq.s32.totalorder %v30, 1
    %vm33 = vcmp.eq.s32.totalorder %v31, 1
    %v34 = vsel %vm32, 1, 0
    %v35 = vsel %vm33, 1, 0
    %vm36 = vcmask 80896
    %37 = vst.msk [vmem:[%s1] sm:$0xff] %vm36, %v34
    %38 = vst.msk [vmem:[%s1 + $0x8] sm:$0xff] %vm36, %v35
    // Predicated region
    $region10: #{tpu_custom_call.1} parent=1 // pred_check
      _
    $region11: #{tpu_custom_call.1} parent=1 // pred_check_branch
      %40 = sbr.rel (0) target = $region13
    $region12: #{tpu_custom_call.1} parent=1 // pred_region
      _
    $region13: #{tpu_custom_call.1} parent=1 // pred_fallthru
      _
    // Predicated region
    $region14: #{tpu_custom_call.1} parent=1 // pred_check
      _
    $region15: #{tpu_custom_call.1} parent=1 // pred_check_branch
      %42 = sbr.rel (0) target = $region17
    $region16: #{tpu_custom_call.1} parent=1 // pred_region
      _
    $region17: #{tpu_custom_call.1} parent=1 // pred_fallthru
      _
    %43 = vsyncpa [#allocation3], 1

</llo_original>
